<compile_context>
chip_gen: v7x
topology: tpu7x:2x2x1
jax: 0.10.0
libtpu: 0.0.40
codegen_flags: <defaults>
</compile_context>

<pallas_src>
import jax
import jax.numpy as jnp
from jax.experimental import pallas as pl
from jax.experimental.pallas import tpu as pltpu


_LANE = 128      # vreg lane width  -> last-dim alignment
_SUBLANE = 8     # f32 sublane      -> batch-tile alignment


def _round_up(x, m):
    return ((x + m - 1) // m) * m


def _vmem_budget_bytes():
    """Per-generation VMEM sizing (don't throttle v5e/v6e with v7x numbers)."""
    cap = None
    try:
        info = pltpu.get_tpu_info()
        cap = getattr(info, "vmem_capacity_bytes", None)
    except Exception:
        cap = None
    if not cap:
        cap = 64 * 1024 * 1024                       # conservative (v7x physical)
    limit = min((cap * 3) // 4, 96 * 1024 * 1024)    # ~96 MiB on v5e/v6e, ~48 MiB on v7x
    budget = (limit * 3) // 4                        # headroom for Mosaic internals
    return budget, limit


def mlp_kernel(x_ref, w1_ref, b1_ref, w2_ref, b2_ref, o_ref, h_acc):
    k = pl.program_id(1)

    @pl.when(k == 0)
    def _():
        h_acc[...] = jnp.zeros_like(h_acc)

    # First linear on the MXU in the weight dtype (bf16 fast path); f32 accumulate.
    h_acc[...] += jnp.dot(x_ref[...].astype(w1_ref.dtype), w1_ref[...],
                          preferred_element_type=jnp.float32)

    @pl.when(k == pl.num_programs(1) - 1)
    def _():
        h = jnp.maximum(h_acc[...] + b1_ref[...], 0.0)        # bias + ReLU in f32 (VPU)
        out = jnp.dot(h.astype(w2_ref.dtype), w2_ref[...],
                      preferred_element_type=jnp.float32) + b2_ref[...]
        o_ref[...] = out.astype(o_ref.dtype)


def prepare_mlp_params(w1, b1, w2, b2, *, use_bf16=True):
    """Pad/cast the weights ONCE, outside the per-forward hot path.

    w1: (D_in, H), b1: (H,) or (1, H), w2: (H, D_out), b2: (D_out,) or (1, D_out).
    """
    D_in, H = w1.shape
    D_out = w2.shape[1]
    w_dtype = jnp.bfloat16 if use_bf16 else jnp.asarray(w1).dtype

    # TODO(synk): on v6e/v7x pad contraction/output feature dims to multiples of
    # 256 (2x256x256 MXU) when compute-bound; 128 keeps padding FLOPs minimal here.
    D_in_p = _round_up(D_in, _LANE)
    H_p = _round_up(H, _LANE)
    D_out_p = _round_up(D_out, _LANE)

    w1_p = jnp.zeros((D_in_p, H_p), w_dtype).at[:D_in, :H].set(
        jnp.asarray(w1).astype(w_dtype))
    w2_p = jnp.zeros((H_p, D_out_p), w_dtype).at[:H, :D_out].set(
        jnp.asarray(w2).astype(w_dtype))
    b1_p = jnp.zeros((1, H_p), jnp.float32).at[:, :H].set(
        jnp.asarray(b1, jnp.float32).reshape(1, H))
    b2_p = jnp.zeros((1, D_out_p), jnp.float32).at[:, :D_out].set(
        jnp.asarray(b2, jnp.float32).reshape(1, D_out))
    # TODO(synk): optional fp8 weight storage on v7x (bf16+fp8 MXU) to halve
    # weight HBM/VMEM traffic further when accuracy allows.

    return dict(w1=w1_p, b1=b1_p, w2=w2_p, b2=b2_p,
                dims=(D_in, H, D_out), padded=(D_in_p, H_p, D_out_p))


def mlp_forward(x, params, *, tile_b=512):
    """Fused MLP forward: x (B, D_in) -> (B, D_out), same dtype as x."""
    B, D_in = x.shape
    D_in_, H, D_out = params["dims"]
    assert D_in == D_in_, "x feature dim does not match prepared params"
    D_in_p, H_p, D_out_p = params["padded"]
    w1_p, b1_p, w2_p, b2_p = params["w1"], params["b1"], params["w2"], params["b2"]

    out_dtype = x.dtype
    x_itemsize = jnp.dtype(x.dtype).itemsize
    w_itemsize = jnp.dtype(w1_p.dtype).itemsize
    out_itemsize = jnp.dtype(out_dtype).itemsize

    budget, vmem_limit = _vmem_budget_bytes()

    # ---- K split over D_in when resident W1 would blow the VMEM budget ------
    # (keeps the big batch tile instead of shrinking M; mainly matters on v7x).
    # Conservative bookkeeping: count 2 buffers for every weight/bias block.
    const_w_bytes = 2 * H_p * D_out_p * w_itemsize + 2 * (H_p + D_out_p) * 4
    m = D_in_p // _LANE
    num_k = m  # worst case: tk == 128
    for cand in range(1, m + 1):
        if m % cand:
            continue
        tk_c = D_in_p // cand
        if 2 * tk_c * H_p * w_itemsize + const_w_bytes <= budget // 2 or tk_c == _LANE:
            num_k = cand
            break
    tk = D_in_p // num_k

    # ---- batch tile: big (amortize ~0.35us/step), sublane-aligned, capped so
    # ---- the batch grid has >= 2 steps (both v7x TCs get work), fits VMEM. ----
    tile_b = max(_SUBLANE, _round_up(min(tile_b, _round_up(B, _SUBLANE)), _SUBLANE))
    if B >= 2 * _SUBLANE:
        tile_b = min(tile_b, _round_up(pl.cdiv(B, 2), _SUBLANE))

    def vmem_estimate(tb):
        stream = 2 * tb * (tk * x_itemsize + D_out_p * out_itemsize)   # double-buffered x / out
        weights = 2 * tk * H_p * w_itemsize + const_w_bytes
        live = tb * H_p * 4 + tb * D_out_p * 4                         # f32 h_acc + f32 out temp
        return stream + weights + live

    while tile_b > _SUBLANE and vmem_estimate(tile_b) > budget:
        tile_b = max(_SUBLANE, (tile_b // 2) // _SUBLANE * _SUBLANE)

    B_p = _round_up(B, tile_b)
    grid = (B_p // tile_b, num_k)

    # ---- pad x only when actually needed (keep the hot path copy-free) ----
    if B_p != B or D_in_p != D_in:
        x_p = jnp.zeros((B_p, D_in_p), x.dtype).at[:B, :D_in].set(x)
    else:
        x_p = x

    flops = 2 * B_p * (D_in_p * H_p + H_p * D_out_p)
    weight_reads = grid[0] if num_k > 1 else 1   # K-split re-streams W1 per batch tile
    bytes_accessed = int(B_p * D_in_p * x_itemsize + B_p * D_out_p * out_itemsize
                         + (D_in_p * H_p + H_p * D_out_p) * w_itemsize * weight_reads)
    cost = pl.CostEstimate(flops=flops, transcendentals=0, bytes_accessed=bytes_accessed)

    def build(single_buffer_consts):
        def const_spec(shape):
            if single_buffer_consts:
                return pl.BlockSpec(shape, lambda i, k: (0, 0),
                                    pipeline_mode=pl.Buffered(1))
            return pl.BlockSpec(shape, lambda i, k: (0, 0))

        if num_k == 1:
            w1_spec = const_spec((tk, H_p))                       # resident, single-buffered
        else:
            w1_spec = pl.BlockSpec((tk, H_p), lambda i, k: (k, 0))  # streamed over K

        return pl.pallas_call(
            mlp_kernel,
            out_shape=jax.ShapeDtypeStruct((B_p, D_out_p), out_dtype),
            grid_spec=pltpu.PrefetchScalarGridSpec(
                num_scalar_prefetch=0,
                grid=grid,
                in_specs=[
                    pl.BlockSpec((tile_b, tk), lambda i, k: (i, k)),   # x tile (streamed)
                    w1_spec,                                           # W1
                    const_spec((1, H_p)),                              # b1
                    const_spec((H_p, D_out_p)),                        # W2 (resident)
                    const_spec((1, D_out_p)),                          # b2
                ],
                out_specs=pl.BlockSpec((tile_b, D_out_p), lambda i, k: (i, 0)),
                scratch_shapes=[pltpu.VMEM((tile_b, H_p), jnp.float32)],
            ),
            compiler_params=pltpu.CompilerParams(
                dimension_semantics=("parallel", "arbitrary"),
                vmem_limit_bytes=vmem_limit,
            ),
            cost_estimate=cost,
        )

    try:
        out_p = build(True)(x_p, w1_p, b1_p, w2_p, b2_p)
    except Exception:
        # Fallback if this jax build rejects single-buffered (Buffered(1)) specs.
        out_p = build(False)(x_p, w1_p, b1_p, w2_p, b2_p)

    if B_p != B or D_out_p != D_out:
        return out_p[:B, :D_out]
    return out_p


def mlp_reference(x, w1, b1, w2, b2):
    h = jnp.maximum(x @ w1 + b1.reshape(1, -1), 0.0)
    return h @ w2 + b2.reshape(1, -1)


if __name__ == "__main__":
    # Small shapes consistent with the module's forward.
    B, D_in, H, D_out = 8, 32, 64, 16

    key = jax.random.PRNGKey(0)
    k_x, k_w1, k_b1, k_w2, k_b2, k_x2 = jax.random.split(key, 6)

    x = jax.random.normal(k_x, (B, D_in), dtype=jnp.float32)
    # Deterministic init mimicking nn.Linear's uniform(-1/sqrt(fan_in), 1/sqrt(fan_in)).
    bound1 = 1.0 / (D_in ** 0.5)
    bound2 = 1.0 / (H ** 0.5)
    w1 = jax.random.uniform(k_w1, (D_in, H), minval=-bound1, maxval=bound1, dtype=jnp.float32)
    b1 = jax.random.uniform(k_b1, (H,), minval=-bound1, maxval=bound1, dtype=jnp.float32)
    w2 = jax.random.uniform(k_w2, (H, D_out), minval=-bound2, maxval=bound2, dtype=jnp.float32)
    b2 = jax.random.uniform(k_b2, (D_out,), minval=-bound2, maxval=bound2, dtype=jnp.float32)

    # 1) Exact f32 path (small batch).
    params_f32 = prepare_mlp_params(w1, b1, w2, b2, use_bf16=False)
    out = jax.block_until_ready(mlp_forward(x, params_f32))
    ref = mlp_reference(x, w1, b1, w2, b2)
    assert out.shape == (B, D_out)
    assert jnp.allclose(out, ref, atol=1e-5, rtol=1e-5), "f32 mismatch vs reference"

    # 2) Larger, non-divisible batch: grid > 1 (pipelining / both v7x TCs) and
    #    batch-remainder padding.
    B2 = 300
    x2 = jax.random.normal(k_x2, (B2, D_in), dtype=jnp.float32)
    out2 = jax.block_until_ready(mlp_forward(x2, params_f32))
    ref2 = mlp_reference(x2, w1, b1, w2, b2)
    assert out2.shape == (B2, D_out)
    assert jnp.allclose(out2, ref2, atol=1e-5, rtol=1e-5), "tiled f32 mismatch vs reference"

    # 3) Default bf16-weight MXU path (f32 accumulation), looser tolerance.
    params_bf16 = prepare_mlp_params(w1, b1, w2, b2)   # use_bf16=True by default
    out3 = jax.block_until_ready(mlp_forward(x2, params_bf16))
    assert out3.shape == (B2, D_out)
    assert jnp.allclose(out3, ref2, atol=5e-2, rtol=5e-2), "bf16 mismatch vs reference"

    print("KERNEL_OK")
</pallas_src>

<mosaic_0001>
module attributes {stable_mosaic.version = 11 : i64} {
  func.func @mlp_kernel(%arg0: i32, %arg1: i32, %arg2: memref<8x128xf32, #tpu.memory_space<vmem>>, %arg3: memref<128x128xf32, #tpu.memory_space<vmem>>, %arg4: memref<1x128xf32, #tpu.memory_space<vmem>>, %arg5: memref<128x128xf32, #tpu.memory_space<vmem>>, %arg6: memref<1x128xf32, #tpu.memory_space<vmem>>, %arg7: memref<8x128xf32, #tpu.memory_space<vmem>>, %arg8: memref<8x128xf32, #tpu.memory_space<vmem>>) attributes {dimension_semantics = [#tpu.dimension_semantics<parallel>, #tpu.dimension_semantics<arbitrary>], iteration_bounds = array<i64: 1, 1>, scalar_prefetch = 0 : i64, scratch_operands = 1 : i64, tpu.core_type = #tpu.core_type<tc>, window_params = [{transform_indices = @transform_0, window_bounds = array<i64: 8, 128>}, {pipeline_mode = #tpu.pipeline_mode<synchronous>, transform_indices = @transform_1, window_bounds = array<i64: 128, 128>}, {pipeline_mode = #tpu.pipeline_mode<synchronous>, transform_indices = @transform_2, window_bounds = array<i64: 1, 128>}, {pipeline_mode = #tpu.pipeline_mode<synchronous>, transform_indices = @transform_3, window_bounds = array<i64: 128, 128>}, {pipeline_mode = #tpu.pipeline_mode<synchronous>, transform_indices = @transform_4, window_bounds = array<i64: 1, 128>}, {transform_indices = @transform_5, window_bounds = array<i64: 8, 128>}]} {
    %c0_i32 = arith.constant 0 : i32
    %0 = arith.cmpi eq, %arg1, %c0_i32 : i32
    %1 = arith.extui %0 : i1 to i32
    %c0_i32_0 = arith.constant 0 : i32
    %2 = arith.cmpi ne, %1, %c0_i32_0 : i32
    scf.if %2 {
      %cst_10 = arith.constant 0.000000e+00 : f32
      %12 = vector.broadcast %cst_10 : f32 to vector<8x128xf32>
      %c0_11 = arith.constant 0 : index
      %c0_12 = arith.constant 0 : index
      %13 = vector.load %arg8[%c0_11, %c0_12] : memref<8x128xf32, #tpu.memory_space<vmem>>, vector<8x128xf32>
      tpu.vector_store %arg8[%c0_11, %c0_12], %12 {strides = array<i32>} : memref<8x128xf32, #tpu.memory_space<vmem>>, vector<8x128xf32>,
    } else {
    }
    %c0 = arith.constant 0 : index
    %c0_1 = arith.constant 0 : index
    %3 = vector.load %arg8[%c0, %c0_1] : memref<8x128xf32, #tpu.memory_space<vmem>>, vector<8x128xf32>
    %c0_2 = arith.constant 0 : index
    %c0_3 = arith.constant 0 : index
    %4 = vector.load %arg2[%c0_2, %c0_3] : memref<8x128xf32, #tpu.memory_space<vmem>>, vector<8x128xf32>
    %c0_4 = arith.constant 0 : index
    %c0_5 = arith.constant 0 : index
    %5 = vector.load %arg3[%c0_4, %c0_5] : memref<128x128xf32, #tpu.memory_space<vmem>>, vector<128x128xf32>
    %cst = arith.constant dense<0.000000e+00> : vector<8x128xf32>
    %6 = tpu.matmul %4, %5, %cst {dimension_numbers = #tpu.dot_dimension_numbers<[1], [0], [0], [1], [0, 0, 1, 1], [], []>} : vector<8x128xf32>, vector<128x128xf32>, vector<8x128xf32> -> vector<8x128xf32>
    %7 = arith.addf %3, %6 : vector<8x128xf32>
    %c0_6 = arith.constant 0 : index
    %c0_7 = arith.constant 0 : index
    %8 = vector.load %arg8[%c0_6, %c0_7] : memref<8x128xf32, #tpu.memory_space<vmem>>, vector<8x128xf32>
    tpu.vector_store %arg8[%c0_6, %c0_7], %7 {strides = array<i32>} : memref<8x128xf32, #tpu.memory_space<vmem>>, vector<8x128xf32>,
    %c0_i32_8 = arith.constant 0 : i32
    %9 = arith.cmpi eq, %arg1, %c0_i32_8 : i32
    %10 = arith.extui %9 : i1 to i32
    %c0_i32_9 = arith.constant 0 : i32
    %11 = arith.cmpi ne, %10, %c0_i32_9 : i32
    scf.if %11 {
      %c0_10 = arith.constant 0 : index
      %c0_11 = arith.constant 0 : index
      %12 = vector.load %arg8[%c0_10, %c0_11] : memref<8x128xf32, #tpu.memory_space<vmem>>, vector<8x128xf32>
      %c0_12 = arith.constant 0 : index
      %c0_13 = arith.constant 0 : index
      %13 = vector.load %arg4[%c0_12, %c0_13] : memref<1x128xf32, #tpu.memory_space<vmem>>, vector<1x128xf32>
      %14 = vector.broadcast %13 : vector<1x128xf32> to vector<8x128xf32>
      %15 = arith.addf %12, %14 : vector<8x128xf32>
      %cst_14 = arith.constant 0.000000e+00 : f32
      %16 = vector.broadcast %cst_14 : f32 to vector<8x128xf32>
      %17 = arith.maximumf %15, %16 : vector<8x128xf32>
      %c0_15 = arith.constant 0 : index
      %c0_16 = arith.constant 0 : index
      %18 = vector.load %arg5[%c0_15, %c0_16] : memref<128x128xf32, #tpu.memory_space<vmem>>, vector<128x128xf32>
      %cst_17 = arith.constant dense<0.000000e+00> : vector<8x128xf32>
      %19 = tpu.matmul %17, %18, %cst_17 {dimension_numbers = #tpu.dot_dimension_numbers<[1], [0], [0], [1], [0, 0, 1, 1], [], []>} : vector<8x128xf32>, vector<128x128xf32>, vector<8x128xf32> -> vector<8x128xf32>
      %c0_18 = arith.constant 0 : index
      %c0_19 = arith.constant 0 : index
      %20 = vector.load %arg6[%c0_18, %c0_19] : memref<1x128xf32, #tpu.memory_space<vmem>>, vector<1x128xf32>
      %21 = vector.broadcast %20 : vector<1x128xf32> to vector<8x128xf32>
      %22 = arith.addf %19, %21 : vector<8x128xf32>
      %c0_20 = arith.constant 0 : index
      %c0_21 = arith.constant 0 : index
      %23 = vector.load %arg7[%c0_20, %c0_21] : memref<8x128xf32, #tpu.memory_space<vmem>>, vector<8x128xf32>
      tpu.vector_store %arg7[%c0_20, %c0_21], %22 {strides = array<i32>} : memref<8x128xf32, #tpu.memory_space<vmem>>, vector<8x128xf32>,
    } else {
    }
    return
  }
  func.func @transform_0(%arg0: i32, %arg1: i32) -> (i32, i32) {
    %c0_i32 = arith.constant 0 : i32
    return %arg0, %arg1 : i32, i32
  }
  func.func @transform_1(%arg0: i32, %arg1: i32) -> (i32, i32) {
    %c0_i32 = arith.constant 0 : i32
    %c0_i32_0 = arith.constant 0 : i32
    %c0_i32_1 = arith.constant 0 : i32
    return %c0_i32, %c0_i32_0 : i32, i32
  }
  func.func @transform_2(%arg0: i32, %arg1: i32) -> (i32, i32) {
    %c0_i32 = arith.constant 0 : i32
    %c0_i32_0 = arith.constant 0 : i32
    %c0_i32_1 = arith.constant 0 : i32
    return %c0_i32, %c0_i32_0 : i32, i32
  }
  func.func @transform_3(%arg0: i32, %arg1: i32) -> (i32, i32) {
    %c0_i32 = arith.constant 0 : i32
    %c0_i32_0 = arith.constant 0 : i32
    %c0_i32_1 = arith.constant 0 : i32
    return %c0_i32, %c0_i32_0 : i32, i32
  }
  func.func @transform_4(%arg0: i32, %arg1: i32) -> (i32, i32) {
    %c0_i32 = arith.constant 0 : i32
    %c0_i32_0 = arith.constant 0 : i32
    %c0_i32_1 = arith.constant 0 : i32
    return %c0_i32, %c0_i32_0 : i32, i32
  }
  func.func @transform_5(%arg0: i32, %arg1: i32) -> (i32, i32) {
    %c0_i32 = arith.constant 0 : i32
    %c0_i32_0 = arith.constant 0 : i32
    return %arg0, %c0_i32 : i32, i32
  }
}

module attributes {stable_mosaic.version = 11 : i64} {
  func.func @mlp_kernel(%arg0: i32, %arg1: i32, %arg2: memref<8x128xf32, #tpu.memory_space<vmem>>, %arg3: memref<128x128xf32, #tpu.memory_space<vmem>>, %arg4: memref<1x128xf32, #tpu.memory_space<vmem>>, %arg5: memref<128x128xf32, #tpu.memory_space<vmem>>, %arg6: memref<1x128xf32, #tpu.memory_space<vmem>>, %arg7: memref<8x128xf32, #tpu.memory_space<vmem>>, %arg8: memref<8x128xf32, #tpu.memory_space<vmem>>) attributes {dimension_semantics = [#tpu.dimension_semantics<parallel>, #tpu.dimension_semantics<arbitrary>], iteration_bounds = array<i64: 1, 1>, scalar_prefetch = 0 : i64, scratch_operands = 1 : i64, tpu.core_type = #tpu.core_type<tc>, window_params = [{transform_indices = @transform_0, window_bounds = array<i64: 8, 128>}, {pipeline_mode = #tpu.pipeline_mode<synchronous>, transform_indices = @transform_1, window_bounds = array<i64: 128, 128>}, {pipeline_mode = #tpu.pipeline_mode<synchronous>, transform_indices = @transform_2, window_bounds = array<i64: 1, 128>}, {pipeline_mode = #tpu.pipeline_mode<synchronous>, transform_indices = @transform_3, window_bounds = array<i64: 128, 128>}, {pipeline_mode = #tpu.pipeline_mode<synchronous>, transform_indices = @transform_4, window_bounds = array<i64: 1, 128>}, {transform_indices = @transform_5, window_bounds = array<i64: 8, 128>}]} {
    %c0_i32 = arith.constant 0 : i32
    %0 = arith.cmpi eq, %arg1, %c0_i32 : i32
    %1 = arith.extui %0 : i1 to i32
    %c0_i32_0 = arith.constant 0 : i32
    %2 = arith.cmpi ne, %1, %c0_i32_0 : i32
    scf.if %2 {
      %cst_10 = arith.constant 0.000000e+00 : f32
      %12 = vector.broadcast %cst_10 : f32 to vector<8x128xf32>
      %c0_11 = arith.constant 0 : index
      %c0_12 = arith.constant 0 : index
      %13 = vector.load %arg8[%c0_11, %c0_12] : memref<8x128xf32, #tpu.memory_space<vmem>>, vector<8x128xf32>
      tpu.vector_store %arg8[%c0_11, %c0_12], %12 {strides = array<i32>} : memref<8x128xf32, #tpu.memory_space<vmem>>, vector<8x128xf32>,
    } else {
    }
    %c0 = arith.constant 0 : index
    %c0_1 = arith.constant 0 : index
    %3 = vector.load %arg8[%c0, %c0_1] : memref<8x128xf32, #tpu.memory_space<vmem>>, vector<8x128xf32>
    %c0_2 = arith.constant 0 : index
    %c0_3 = arith.constant 0 : index
    %4 = vector.load %arg2[%c0_2, %c0_3] : memref<8x128xf32, #tpu.memory_space<vmem>>, vector<8x128xf32>
    %c0_4 = arith.constant 0 : index
    %c0_5 = arith.constant 0 : index
    %5 = vector.load %arg3[%c0_4, %c0_5] : memref<128x128xf32, #tpu.memory_space<vmem>>, vector<128x128xf32>
    %cst = arith.constant dense<0.000000e+00> : vector<8x128xf32>
    %6 = tpu.matmul %4, %5, %cst {dimension_numbers = #tpu.dot_dimension_numbers<[1], [0], [0], [1], [0, 0, 1, 1], [], []>} : vector<8x128xf32>, vector<128x128xf32>, vector<8x128xf32> -> vector<8x128xf32>
    %7 = arith.addf %3, %6 : vector<8x128xf32>
    %c0_6 = arith.constant 0 : index
    %c0_7 = arith.constant 0 : index
    %8 = vector.load %arg8[%c0_6, %c0_7] : memref<8x128xf32, #tpu.memory_space<vmem>>, vector<8x128xf32>
    tpu.vector_store %arg8[%c0_6, %c0_7], %7 {strides = array<i32>} : memref<8x128xf32, #tpu.memory_space<vmem>>, vector<8x128xf32>,
    %c0_i32_8 = arith.constant 0 : i32
    %9 = arith.cmpi eq, %arg1, %c0_i32_8 : i32
    %10 = arith.extui %9 : i1 to i32
    %c0_i32_9 = arith.constant 0 : i32
    %11 = arith.cmpi ne, %10, %c0_i32_9 : i32
    scf.if %11 {
      %c0_10 = arith.constant 0 : index
      %c0_11 = arith.constant 0 : index
      %12 = vector.load %arg8[%c0_10, %c0_11] : memref<8x128xf32, #tpu.memory_space<vmem>>, vector<8x128xf32>
      %c0_12 = arith.constant 0 : index
      %c0_13 = arith.constant 0 : index
      %13 = vector.load %arg4[%c0_12, %c0_13] : memref<1x128xf32, #tpu.memory_space<vmem>>, vector<1x128xf32>
      %14 = vector.broadcast %13 : vector<1x128xf32> to vector<8x128xf32>
      %15 = arith.addf %12, %14 : vector<8x128xf32>
      %cst_14 = arith.constant 0.000000e+00 : f32
      %16 = vector.broadcast %cst_14 : f32 to vector<8x128xf32>
      %17 = arith.maximumf %15, %16 : vector<8x128xf32>
      %c0_15 = arith.constant 0 : index
      %c0_16 = arith.constant 0 : index
      %18 = vector.load %arg5[%c0_15, %c0_16] : memref<128x128xf32, #tpu.memory_space<vmem>>, vector<128x128xf32>
      %cst_17 = arith.constant dense<0.000000e+00> : vector<8x128xf32>
      %19 = tpu.matmul %17, %18, %cst_17 {dimension_numbers = #tpu.dot_dimension_numbers<[1], [0], [0], [1], [0, 0, 1, 1], [], []>} : vector<8x128xf32>, vector<128x128xf32>, vector<8x128xf32> -> vector<8x128xf32>
      %c0_18 = arith.constant 0 : index
      %c0_19 = arith.constant 0 : index
      %20 = vector.load %arg6[%c0_18, %c0_19] : memref<1x128xf32, #tpu.memory_space<vmem>>, vector<1x128xf32>
      %21 = vector.broadcast %20 : vector<1x128xf32> to vector<8x128xf32>
      %22 = arith.addf %19, %21 : vector<8x128xf32>
      %c0_20 = arith.constant 0 : index
      %c0_21 = arith.constant 0 : index
      %23 = vector.load %arg7[%c0_20, %c0_21] : memref<8x128xf32, #tpu.memory_space<vmem>>, vector<8x128xf32>
      tpu.vector_store %arg7[%c0_20, %c0_21], %22 {strides = array<i32>} : memref<8x128xf32, #tpu.memory_space<vmem>>, vector<8x128xf32>,
    } else {
    }
    return
  }
  func.func @transform_0(%arg0: i32, %arg1: i32) -> (i32, i32) {
    %c0_i32 = arith.constant 0 : i32
    return %arg0, %arg1 : i32, i32
  }
  func.func @transform_1(%arg0: i32, %arg1: i32) -> (i32, i32) {
    %c0_i32 = arith.constant 0 : i32
    %c0_i32_0 = arith.constant 0 : i32
    %c0_i32_1 = arith.constant 0 : i32
    return %c0_i32, %c0_i32_0 : i32, i32
  }
  func.func @transform_2(%arg0: i32, %arg1: i32) -> (i32, i32) {
    %c0_i32 = arith.constant 0 : i32
    %c0_i32_0 = arith.constant 0 : i32
    %c0_i32_1 = arith.constant 0 : i32
    return %c0_i32, %c0_i32_0 : i32, i32
  }
  func.func @transform_3(%arg0: i32, %arg1: i32) -> (i32, i32) {
    %c0_i32 = arith.constant 0 : i32
    %c0_i32_0 = arith.constant 0 : i32
    %c0_i32_1 = arith.constant 0 : i32
    return %c0_i32, %c0_i32_0 : i32, i32
  }
  func.func @transform_4(%arg0: i32, %arg1: i32) -> (i32, i32) {
    %c0_i32 = arith.constant 0 : i32
    %c0_i32_0 = arith.constant 0 : i32
    %c0_i32_1 = arith.constant 0 : i32
    return %c0_i32, %c0_i32_0 : i32, i32
  }
  func.func @transform_5(%arg0: i32, %arg1: i32) -> (i32, i32) {
    %c0_i32 = arith.constant 0 : i32
    %c0_i32_0 = arith.constant 0 : i32
    return %arg0, %c0_i32 : i32, i32
  }
}

</mosaic_0001>

<llo_original>
// kernel: tpu_custom_call.1
$region0: #{tpu_custom_call.1}
  #allocation0 [shape = 'u32[]', space=smem, size = 0x4, offset = 0x4, fixed_abs, tag = 'smem constant byte address 0x4 - core index']
  #allocation1 [shape = 'u32[144,128]{1,0:T(1,128)}', space=vmem, size = 0x12000, scoped, tag = 'internal scratch']
  #allocation2 [shape = 'f32[8,128]{1,0:T(8,128)}', space=vmem, size = 0x1000, scoped, tag = 'scratch operand']
  %s0 = inlined_call_operand.hbm [shape: f32[8,128], index: 0, kind: input, shape index: {}]
  %s1 = inlined_call_operand.hbm [shape: f32[128,128], index: 1, kind: input, shape index: {}]
  %s2 = inlined_call_operand.vmem [shape: f32[1,128], index: 2, kind: input, shape index: {}]
  %s3 = inlined_call_operand.hbm [shape: f32[128,128], index: 3, kind: input, shape index: {}]
  %s4 = inlined_call_operand.vmem [shape: f32[1,128], index: 4, kind: input, shape index: {}]
  %s5 = inlined_call_operand.hbm [shape: f32[8,128], index: 5, kind: output, shape index: {}]
  %s6 = sld [smem:[#allocation0]]
  $region50: #{tpu_custom_call.1} parent=0
    _
  %s8 = ssub.s32 1, %s6
  %s9 = scalar_select 0, %s8, %s6
  $region1: #{tpu_custom_call.1} parent=0
    #allocation3 [shape = 'u8[4096]{0}', space=vmem, size = 0x1000, scoped, tag = 'input window, operand 0, single buffered']
    #allocation4 [shape = 's32[1]{0}', space=sflag, size = 0x4, scoped, tag = 'scoped memory for tpu_custom_call.1']
    #allocation5 [shape = 's32[1]{0}', space=sflag, size = 0x4, scoped, tag = 'scoped memory for tpu_custom_call.1']
    #allocation6 [shape = 'u8[65536]{0}', space=vmem, size = 0x10000, scoped, tag = 'input window, operand 1, single buffered']
    #allocation7 [shape = 's32[1]{0}', space=sflag, size = 0x4, scoped, tag = 'scoped memory for tpu_custom_call.1']
    #allocation8 [shape = 'u8[65536]{0}', space=vmem, size = 0x10000, scoped, tag = 'input window, operand 3, single buffered']
    #allocation9 [shape = 'u8[4096]{0}', space=vmem, size = 0x1000, scoped, tag = 'output window, operand 0, single buffered']
    %10 = vsyncpa [#allocation4], 0
    %11 = vsyncpa [#allocation7], 0
    %12 = vsyncpa [#allocation5], 0
    // Predicated region
    $region2: #{tpu_custom_call.1} parent=1 // pred_check
      _
    $region3: #{tpu_custom_call.1} parent=1 // pred_check_branch
      %14 = sbr.rel (0) target = $region5
    $region4: #{tpu_custom_call.1} parent=1 // pred_region
      %s16 = ssub.s32 128, 128
      %17 = vsyncadd [#allocation4], %s16
      %s19 = sshll.u32 [#allocation3], 4
      %s20 = int_to_ptr.vmem [resolvable:$true] %s19
      %22 = dma.hbm_to_vmem [thread:$0]  %s0, 128, %s20, [#allocation4]
    $region5: #{tpu_custom_call.1} parent=1 // pred_fallthru
      _
    // Predicated region
    $region6: #{tpu_custom_call.1} parent=1 // pred_check
      _
    $region7: #{tpu_custom_call.1} parent=1 // pred_check_branch
      %24 = sbr.rel (0) target = $region9
    $region8: #{tpu_custom_call.1} parent=1 // pred_region
      %s26 = ssub.s32 2048, 2048
      %27 = vsyncadd [#allocation7], %s26
      %s28 = sshll.u32 [#allocation6], 4
      %s29 = int_to_ptr.vmem [resolvable:$true] %s28
      %34 = dma.hbm_to_vmem [thread:$0]  %s1, 2048, %s29, [#allocation7], 128, 128, 8
    $region9: #{tpu_custom_call.1} parent=1 // pred_fallthru
      _
    // Predicated region
    $region10: #{tpu_custom_call.1} parent=1 // pred_check
      _
    $region11: #{tpu_custom_call.1} parent=1 // pred_check_branch
      %36 = sbr.rel (0) target = $region13
    $region12: #{tpu_custom_call.1} parent=1 // pred_region
      _
    $region13: #{tpu_custom_call.1} parent=1 // pred_fallthru
      _
    // Predicated region
    $region14: #{tpu_custom_call.1} parent=1 // pred_check
      _
    $region15: #{tpu_custom_call.1} parent=1 // pred_check_branch
      %38 = sbr.rel (0) target = $region17
    $region16: #{tpu_custom_call.1} parent=1 // pred_region
      %s40 = ssub.s32 2048, 2048
      %41 = vsyncadd [#allocation7], %s40
      %s42 = sshll.u32 [#allocation8], 4
      %s43 = int_to_ptr.vmem [resolvable:$true] %s42
      %48 = dma.hbm_to_vmem [thread:$0]  %s3, 2048, %s43, [#allocation7], 128, 128, 8
    $region17: #{tpu_custom_call.1} parent=1 // pred_fallthru
      _
    // Predicated region
    $region18: #{tpu_custom_call.1} parent=1 // pred_check
      _
    $region19: #{tpu_custom_call.1} parent=1 // pred_check_branch
      %50 = sbr.rel (0) target = $region21
    $region20: #{tpu_custom_call.1} parent=1 // pred_region
      _
    $region21: #{tpu_custom_call.1} parent=1 // pred_fallthru
      _
    // Predicated region
    $region22: #{tpu_custom_call.1} parent=1 // pred_check
      _
    $region23: #{tpu_custom_call.1} parent=1 // pred_check_branch
      %52 = sbr.rel (0) target = $region25
    $region24: #{tpu_custom_call.1} parent=1 // pred_region
      %53 = dma.done [#allocation4], 128
    $region25: #{tpu_custom_call.1} parent=1 // pred_fallthru
      _
    // Predicated region
    $region26: #{tpu_custom_call.1} parent=1 // pred_check
      _
    $region27: #{tpu_custom_call.1} parent=1 // pred_check_branch
      %55 = sbr.rel (0) target = $region29
    $region28: #{tpu_custom_call.1} parent=1 // pred_region
      %56 = dma.done [#allocation7], 2048
    $region29: #{tpu_custom_call.1} parent=1 // pred_fallthru
      _
    // Predicated region
    $region30: #{tpu_custom_call.1} parent=1 // pred_check
      _
    $region31: #{tpu_custom_call.1} parent=1 // pred_check_branch
      %58 = sbr.rel (0) target = $region33
    $region32: #{tpu_custom_call.1} parent=1 // pred_region
      %59 = dma.done [#allocation7], 2048
    $region33: #{tpu_custom_call.1} parent=1 // pred_fallthru
      _
    %p60 = scmp.eq.s32.totalorder 0, 0
    // Predicated region
    $region34: #{tpu_custom_call.1} parent=1 // pred_check
      %p61 = pneg %p60
    $region35: #{tpu_custom_call.1} parent=1 // pred_check_branch
      %63 = sbr.rel (%p61) target = $region37
    $region36: #{tpu_custom_call.1} parent=1 // pred_region
      %64 = vst [vmem:[#allocation2] sm:$0xff] 0.0
    $region37: #{tpu_custom_call.1} parent=1 // pred_fallthru
      _
    %v65 = vld [vmem:[#allocation2] sm:$0xff]
    %v66 = vld [vmem:[#allocation3] sm:$0xff]
    %v67 = vld [vmem:[#allocation6] sm:$0xff]
    %v68 = vld [vmem:[#allocation6 + $0x8] sm:$0xff]
    %v69 = vld [vmem:[#allocation6 + $0x10] sm:$0xff]
    %v70 = vld [vmem:[#allocation6 + $0x18] sm:$0xff]
    %v71 = vld [vmem:[#allocation6 + $0x20] sm:$0xff]
    %v72 = vld [vmem:[#allocation6 + $0x28] sm:$0xff]
    %v73 = vld [vmem:[#allocation6 + $0x30] sm:$0xff]
    %v74 = vld [vmem:[#allocation6 + $0x38] sm:$0xff]
    %v75 = vld [vmem:[#allocation6 + $0x40] sm:$0xff]
    %v76 = vld [vmem:[#allocation6 + $0x48] sm:$0xff]
    %v77 = vld [vmem:[#allocation6 + $0x50] sm:$0xff]
    %v78 = vld [vmem:[#allocation6 + $0x58] sm:$0xff]
    %v79 = vld [vmem:[#allocation6 + $0x60] sm:$0xff]
    %v80 = vld [vmem:[#allocation6 + $0x68] sm:$0xff]
    %v81 = vld [vmem:[#allocation6 + $0x70] sm:$0xff]
    %v82 = vld [vmem:[#allocation6 + $0x78] sm:$0xff]
    %83 = vmatprep.subr.mxu0 0.0
    %84 = vmatpush1.msra.mxu0 %v67
    %85 = vmatprep.subr.mxu0 0.0
    %86 = vmatpush1.msra.mxu0 %v68
    %87 = vmatprep.subr.mxu0 0.0
    %88 = vmatpush1.msra.mxu0 %v69
    %89 = vmatprep.subr.mxu0 0.0
    %90 = vmatpush1.msra.mxu0 %v70
    %91 = vmatprep.subr.mxu0 0.0
    %92 = vmatpush1.msra.mxu0 %v71
    %93 = vmatprep.subr.mxu0 0.0
    %94 = vmatpush1.msra.mxu0 %v72
    %95 = vmatprep.subr.mxu0 0.0
    %96 = vmatpush1.msra.mxu0 %v73
    %97 = vmatprep.subr.mxu0 0.0
    %98 = vmatpush1.msra.mxu0 %v74
    %99 = vmatprep.subr.mxu0 0.0
    %100 = vmatpush1.msra.mxu0 %v75
    %101 = vmatprep.subr.mxu0 0.0
    %102 = vmatpush1.msra.mxu0 %v76
    %103 = vmatprep.subr.mxu0 0.0
    %104 = vmatpush1.msra.mxu0 %v77
    %105 = vmatprep.subr.mxu0 0.0
    %106 = vmatpush1.msra.mxu0 %v78
    %107 = vmatprep.subr.mxu0 0.0
    %108 = vmatpush1.msra.mxu0 %v79
    %109 = vmatprep.subr.mxu0 0.0
    %110 = vmatpush1.msra.mxu0 %v80
    %111 = vmatprep.subr.mxu0 0.0
    %112 = vmatpush1.msra.mxu0 %v81
    %113 = vmatprep.subr.mxu0 0.0
    %114 = vmatpush1.msra.mxu0 %v82
    %115 = vmatprep.subr.mxu0 0.0
    %116 = vmatpush1.msra.mxu0 0.0
    %117 = vmatprep.subr.mxu0 0.0
    %118 = vmatpush1.msra.mxu0 0.0
    %119 = vmatprep.subr.mxu0 0.0
    %120 = vmatpush1.msra.mxu0 0.0
    %121 = vmatprep.subr.mxu0 0.0
    %122 = vmatpush1.msra.mxu0 0.0
    %123 = vmatprep.subr.mxu0 0.0
    %124 = vmatpush1.msra.mxu0 0.0
    %125 = vmatprep.subr.mxu0 0.0
    %126 = vmatpush1.msra.mxu0 0.0
    %127 = vmatprep.subr.mxu0 0.0
    %128 = vmatpush1.msra.mxu0 0.0
    %129 = vmatprep.subr.mxu0 0.0
    %130 = vmatpush1.msra.mxu0 0.0
    %131 = vmatprep.subr.mxu0 0.0
    %132 = vmatpush1.msra.mxu0 0.0
    %133 = vmatprep.subr.mxu0 0.0
    %134 = vmatpush1.msra.mxu0 0.0
    %135 = vmatprep.subr.mxu0 0.0
    %136 = vmatpush1.msra.mxu0 0.0
    %137 = vmatprep.subr.mxu0 0.0
    %138 = vmatpush1.msra.mxu0 0.0
    %139 = vmatprep.subr.mxu0 0.0
    %140 = vmatpush1.msra.mxu0 0.0
    %141 = vmatprep.subr.mxu0 0.0
    %142 = vmatpush1.msra.mxu0 0.0
    %143 = vmatprep.subr.mxu0 0.0
    %144 = vmatpush1.msra.mxu0 0.0
    %145 = vmatprep.subr.mxu0 0.0
    %146 = vmatpush1.msra.mxu0 0.0
    %147 = vmatprep.mubr.f32.mxu0 0.0
    %148 = vmatmul.mubr.f32.gmra.mrb[0].mxu0 %v66
    %v149 = vpop.f32.mrb[0].mxu0
    %v150 = vadd.f32 0.0, %v149
    %v151 = vpop.f32.mrb[0].mxu0
    %152 = vdwg.mxu0
    %v153 = vadd.f32 %v65, %v150
    %154 = vst [vmem:[#allocation2] sm:$0xff] %v153
    // Predicated region
    $region38: #{tpu_custom_call.1} parent=1 // pred_check
      %p155 = pneg %p60
    $region39: #{tpu_custom_call.1} parent=1 // pred_check_branch
      %157 = sbr.rel (%p155) target = $region41
    $region40: #{tpu_custom_call.1} parent=1 // pred_region
      %v158 = vld [vmem:[#allocation2] sm:$0xff]
      %v159 = vld [vmem:[%s2] sm:$0x1]
      %v161 = vlaneseq
      %v162 = vshrl.u32 %v161, 7
      %v163 = vsub.s32 0, %v162
      %v164 = vrot.slane %v159, %v163
      %v166 = vadd.f32 %v158, %v164
      %v167 = vmax.f32 %v166, 0.0
      %v168 = vld [vmem:[#allocation8] sm:$0xff]
      %v169 = vld [vmem:[#allocation8 + $0x8] sm:$0xff]
      %v170 = vld [vmem:[#allocation8 + $0x10] sm:$0xff]
      %v171 = vld [vmem:[#allocation8 + $0x18] sm:$0xff]
      %v172 = vld [vmem:[#allocation8 + $0x20] sm:$0xff]
      %v173 = vld [vmem:[#allocation8 + $0x28] sm:$0xff]
      %v174 = vld [vmem:[#allocation8 + $0x30] sm:$0xff]
      %v175 = vld [vmem:[#allocation8 + $0x38] sm:$0xff]
      %v176 = vld [vmem:[#allocation8 + $0x40] sm:$0xff]
      %v177 = vld [vmem:[#allocation8 + $0x48] sm:$0xff]
      %v178 = vld [vmem:[#allocation8 + $0x50] sm:$0xff]
      %v179 = vld [vmem:[#allocation8 + $0x58] sm:$0xff]
      %v180 = vld [vmem:[#allocation8 + $0x60] sm:$0xff]
      %v181 = vld [vmem:[#allocation8 + $0x68] sm:$0xff]
      %v182 = vld [vmem:[#allocation8 + $0x70] sm:$0xff]
      %v183 = vld [vmem:[#allocation8 + $0x78] sm:$0xff]
      %v184 = vld [vmem:[%s4] sm:$0x1]
      %v186 = vlaneseq
      %v187 = vshrl.u32 %v186, 7
      %v188 = vsub.s32 0, %v187
      %v189 = vrot.slane %v184, %v188
      %191 = vmatprep.subr.mxu0 0.0
      %192 = vmatpush1.msra.mxu0 %v168
      %193 = vmatprep.subr.mxu0 0.0
      %194 = vmatpush1.msra.mxu0 %v169
      %195 = vmatprep.subr.mxu0 0.0
      %196 = vmatpush1.msra.mxu0 %v170
      %197 = vmatprep.subr.mxu0 0.0
      %198 = vmatpush1.msra.mxu0 %v171
      %199 = vmatprep.subr.mxu0 0.0
      %200 = vmatpush1.msra.mxu0 %v172
      %201 = vmatprep.subr.mxu0 0.0
      %202 = vmatpush1.msra.mxu0 %v173
      %203 = vmatprep.subr.mxu0 0.0
      %204 = vmatpush1.msra.mxu0 %v174
      %205 = vmatprep.subr.mxu0 0.0
      %206 = vmatpush1.msra.mxu0 %v175
      %207 = vmatprep.subr.mxu0 0.0
      %208 = vmatpush1.msra.mxu0 %v176
      %209 = vmatprep.subr.mxu0 0.0
      %210 = vmatpush1.msra.mxu0 %v177
      %211 = vmatprep.subr.mxu0 0.0
      %212 = vmatpush1.msra.mxu0 %v178
      %213 = vmatprep.subr.mxu0 0.0
      %214 = vmatpush1.msra.mxu0 %v179
      %215 = vmatprep.subr.mxu0 0.0
      %216 = vmatpush1.msra.mxu0 %v180
      %217 = vmatprep.subr.mxu0 0.0
      %218 = vmatpush1.msra.mxu0 %v181
      %219 = vmatprep.subr.mxu0 0.0
      %220 = vmatpush1.msra.mxu0 %v182
      %221 = vmatprep.subr.mxu0 0.0
      %222 = vmatpush1.msra.mxu0 %v183
      %223 = vmatprep.subr.mxu0 0.0
      %224 = vmatpush1.msra.mxu0 0.0
      %225 = vmatprep.subr.mxu0 0.0
      %226 = vmatpush1.msra.mxu0 0.0
      %227 = vmatprep.subr.mxu0 0.0
      %228 = vmatpush1.msra.mxu0 0.0
      %229 = vmatprep.subr.mxu0 0.0
      %230 = vmatpush1.msra.mxu0 0.0
      %231 = vmatprep.subr.mxu0 0.0
      %232 = vmatpush1.msra.mxu0 0.0
      %233 = vmatprep.subr.mxu0 0.0
      %234 = vmatpush1.msra.mxu0 0.0
      %235 = vmatprep.subr.mxu0 0.0
      %236 = vmatpush1.msra.mxu0 0.0
      %237 = vmatprep.subr.mxu0 0.0
      %238 = vmatpush1.msra.mxu0 0.0
      %239 = vmatprep.subr.mxu0 0.0
      %240 = vmatpush1.msra.mxu0 0.0
      %241 = vmatprep.subr.mxu0 0.0
      %242 = vmatpush1.msra.mxu0 0.0
      %243 = vmatprep.subr.mxu0 0.0
      %244 = vmatpush1.msra.mxu0 0.0
      %245 = vmatprep.subr.mxu0 0.0
      %246 = vmatpush1.msra.mxu0 0.0
      %247 = vmatprep.subr.mxu0 0.0
      %248 = vmatpush1.msra.mxu0 0.0
      %249 = vmatprep.subr.mxu0 0.0
      %250 = vmatpush1.msra.mxu0 0.0
      %251 = vmatprep.subr.mxu0 0.0
      %252 = vmatpush1.msra.mxu0 0.0
      %253 = vmatprep.subr.mxu0 0.0
      %254 = vmatpush1.msra.mxu0 0.0
      %255 = vmatprep.mubr.f32.mxu0 0.0
      %256 = vmatmul.mubr.f32.gmra.mrb[0].mxu0 %v167
      %v257 = vpop.f32.mrb[0].mxu0
      %v258 = vadd.f32 %v189, %v257
      %v259 = vpop.f32.mrb[0].mxu0
      %260 = vdwg.mxu0
      %261 = vst [vmem:[#allocation9] sm:$0xff] %v258
    $region41: #{tpu_custom_call.1} parent=1 // pred_fallthru
      _
    // Predicated region
    $region42: #{tpu_custom_call.1} parent=1 // pred_check
      _
    $region43: #{tpu_custom_call.1} parent=1 // pred_check_branch
      %263 = sbr.rel (0) target = $region45
    $region44: #{tpu_custom_call.1} parent=1 // pred_region
      %s265 = ssub.s32 128, 128
      %266 = vsyncadd [#allocation5], %s265
      %s268 = sshll.u32 [#allocation9], 4
      %s269 = int_to_ptr.vmem [resolvable:$true] %s268
      %271 = dma.vmem_to_hbm [thread:$0]  %s269, 128, %s5, [#allocation5]
    $region45: #{tpu_custom_call.1} parent=1 // pred_fallthru
      _
    // Predicated region
    $region46: #{tpu_custom_call.1} parent=1 // pred_check
      _
    $region47: #{tpu_custom_call.1} parent=1 // pred_check_branch
      %273 = sbr.rel (0) target = $region49
    $region48: #{tpu_custom_call.1} parent=1 // pred_region
      %274 = dma.done [#allocation5], 128
    $region49: #{tpu_custom_call.1} parent=1 // pred_fallthru
      _
    %275 = vsyncpa [#allocation4], 1
    %276 = vsyncpa [#allocation7], 1
    %277 = vsyncpa [#allocation5], 1

// kernel: tpu_custom_call.1
$region0: #{tpu_custom_call.1}
  #allocation0 [shape = 'u32[]', space=smem, size = 0x4, offset = 0x4, fixed_abs, tag = 'smem constant byte address 0x4 - core index']
  #allocation1 [shape = 'u32[144,128]{1,0:T(1,128)}', space=vmem, size = 0x12000, scoped, tag = 'internal scratch']
  #allocation2 [shape = 'f32[8,128]{1,0:T(8,128)}', space=vmem, size = 0x1000, scoped, tag = 'scratch operand']
  %s0 = inlined_call_operand.hbm [shape: f32[8,128], index: 0, kind: input, shape index: {}]
  %s1 = inlined_call_operand.hbm [shape: f32[128,128], index: 1, kind: input, shape index: {}]
  %s2 = inlined_call_operand.vmem [shape: f32[1,128], index: 2, kind: input, shape index: {}]
  %s3 = inlined_call_operand.hbm [shape: f32[128,128], index: 3, kind: input, shape index: {}]
  %s4 = inlined_call_operand.vmem [shape: f32[1,128], index: 4, kind: input, shape index: {}]
  %s5 = inlined_call_operand.hbm [shape: f32[8,128], index: 5, kind: output, shape index: {}]
  %s6 = sld [smem:[#allocation0]]
  $region50: #{tpu_custom_call.1} parent=0
    _
  %s8 = ssub.s32 1, %s6
  %s9 = scalar_select 0, %s8, %s6
  $region1: #{tpu_custom_call.1} parent=0
    #allocation3 [shape = 'u8[4096]{0}', space=vmem, size = 0x1000, scoped, tag = 'input window, operand 0, single buffered']
    #allocation4 [shape = 's32[1]{0}', space=sflag, size = 0x4, scoped, tag = 'scoped memory for tpu_custom_call.1']
    #allocation5 [shape = 's32[1]{0}', space=sflag, size = 0x4, scoped, tag = 'scoped memory for tpu_custom_call.1']
    #allocation6 [shape = 'u8[65536]{0}', space=vmem, size = 0x10000, scoped, tag = 'input window, operand 1, single buffered']
    #allocation7 [shape = 's32[1]{0}', space=sflag, size = 0x4, scoped, tag = 'scoped memory for tpu_custom_call.1']
    #allocation8 [shape = 'u8[65536]{0}', space=vmem, size = 0x10000, scoped, tag = 'input window, operand 3, single buffered']
    #allocation9 [shape = 'u8[4096]{0}', space=vmem, size = 0x1000, scoped, tag = 'output window, operand 0, single buffered']
    %10 = vsyncpa [#allocation4], 0
    %11 = vsyncpa [#allocation7], 0
    %12 = vsyncpa [#allocation5], 0
    // Predicated region
    $region2: #{tpu_custom_call.1} parent=1 // pred_check
      _
    $region3: #{tpu_custom_call.1} parent=1 // pred_check_branch
      %14 = sbr.rel (0) target = $region5
    $region4: #{tpu_custom_call.1} parent=1 // pred_region
      %s16 = ssub.s32 128, 128
      %17 = vsyncadd [#allocation4], %s16
      %s19 = sshll.u32 [#allocation3], 4
      %s20 = int_to_ptr.vmem [resolvable:$true] %s19
      %22 = dma.hbm_to_vmem [thread:$0]  %s0, 128, %s20, [#allocation4]
    $region5: #{tpu_custom_call.1} parent=1 // pred_fallthru
      _
    // Predicated region
    $region6: #{tpu_custom_call.1} parent=1 // pred_check
      _
    $region7: #{tpu_custom_call.1} parent=1 // pred_check_branch
      %24 = sbr.rel (0) target = $region9
    $region8: #{tpu_custom_call.1} parent=1 // pred_region
      %s26 = ssub.s32 2048, 2048
      %27 = vsyncadd [#allocation7], %s26
      %s28 = sshll.u32 [#allocation6], 4
      %s29 = int_to_ptr.vmem [resolvable:$true] %s28
      %34 = dma.hbm_to_vmem [thread:$0]  %s1, 2048, %s29, [#allocation7], 128, 128, 8
    $region9: #{tpu_custom_call.1} parent=1 // pred_fallthru
      _
    // Predicated region
    $region10: #{tpu_custom_call.1} parent=1 // pred_check
      _
    $region11: #{tpu_custom_call.1} parent=1 // pred_check_branch
      %36 = sbr.rel (0) target = $region13
    $region12: #{tpu_custom_call.1} parent=1 // pred_region
      _
    $region13: #{tpu_custom_call.1} parent=1 // pred_fallthru
      _
    // Predicated region
    $region14: #{tpu_custom_call.1} parent=1 // pred_check
      _
    $region15: #{tpu_custom_call.1} parent=1 // pred_check_branch
      %38 = sbr.rel (0) target = $region17
    $region16: #{tpu_custom_call.1} parent=1 // pred_region
      %s40 = ssub.s32 2048, 2048
      %41 = vsyncadd [#allocation7], %s40
      %s42 = sshll.u32 [#allocation8], 4
      %s43 = int_to_ptr.vmem [resolvable:$true] %s42
      %48 = dma.hbm_to_vmem [thread:$0]  %s3, 2048, %s43, [#allocation7], 128, 128, 8
    $region17: #{tpu_custom_call.1} parent=1 // pred_fallthru
      _
    // Predicated region
    $region18: #{tpu_custom_call.1} parent=1 // pred_check
      _
    $region19: #{tpu_custom_call.1} parent=1 // pred_check_branch
      %50 = sbr.rel (0) target = $region21
    $region20: #{tpu_custom_call.1} parent=1 // pred_region
      _
    $region21: #{tpu_custom_call.1} parent=1 // pred_fallthru
      _
    // Predicated region
    $region22: #{tpu_custom_call.1} parent=1 // pred_check
      _
    $region23: #{tpu_custom_call.1} parent=1 // pred_check_branch
      %52 = sbr.rel (0) target = $region25
    $region24: #{tpu_custom_call.1} parent=1 // pred_region
      %53 = dma.done [#allocation4], 128
    $region25: #{tpu_custom_call.1} parent=1 // pred_fallthru
      _
    // Predicated region
    $region26: #{tpu_custom_call.1} parent=1 // pred_check
      _
    $region27: #{tpu_custom_call.1} parent=1 // pred_check_branch
      %55 = sbr.rel (0) target = $region29
    $region28: #{tpu_custom_call.1} parent=1 // pred_region
      %56 = dma.done [#allocation7], 2048
    $region29: #{tpu_custom_call.1} parent=1 // pred_fallthru
      _
    // Predicated region
    $region30: #{tpu_custom_call.1} parent=1 // pred_check
      _
    $region31: #{tpu_custom_call.1} parent=1 // pred_check_branch
      %58 = sbr.rel (0) target = $region33
    $region32: #{tpu_custom_call.1} parent=1 // pred_region
      %59 = dma.done [#allocation7], 2048
    $region33: #{tpu_custom_call.1} parent=1 // pred_fallthru
      _
    %p60 = scmp.eq.s32.totalorder 0, 0
    // Predicated region
    $region34: #{tpu_custom_call.1} parent=1 // pred_check
      %p61 = pneg %p60
    $region35: #{tpu_custom_call.1} parent=1 // pred_check_branch
      %63 = sbr.rel (%p61) target = $region37
    $region36: #{tpu_custom_call.1} parent=1 // pred_region
      %64 = vst [vmem:[#allocation2] sm:$0xff] 0.0
    $region37: #{tpu_custom_call.1} parent=1 // pred_fallthru
      _
    %v65 = vld [vmem:[#allocation2] sm:$0xff]
    %v66 = vld [vmem:[#allocation3] sm:$0xff]
    %v67 = vld [vmem:[#allocation6] sm:$0xff]
    %v68 = vld [vmem:[#allocation6 + $0x8] sm:$0xff]
    %v69 = vld [vmem:[#allocation6 + $0x10] sm:$0xff]
    %v70 = vld [vmem:[#allocation6 + $0x18] sm:$0xff]
    %v71 = vld [vmem:[#allocation6 + $0x20] sm:$0xff]
    %v72 = vld [vmem:[#allocation6 + $0x28] sm:$0xff]
    %v73 = vld [vmem:[#allocation6 + $0x30] sm:$0xff]
    %v74 = vld [vmem:[#allocation6 + $0x38] sm:$0xff]
    %v75 = vld [vmem:[#allocation6 + $0x40] sm:$0xff]
    %v76 = vld [vmem:[#allocation6 + $0x48] sm:$0xff]
    %v77 = vld [vmem:[#allocation6 + $0x50] sm:$0xff]
    %v78 = vld [vmem:[#allocation6 + $0x58] sm:$0xff]
    %v79 = vld [vmem:[#allocation6 + $0x60] sm:$0xff]
    %v80 = vld [vmem:[#allocation6 + $0x68] sm:$0xff]
    %v81 = vld [vmem:[#allocation6 + $0x70] sm:$0xff]
    %v82 = vld [vmem:[#allocation6 + $0x78] sm:$0xff]
    %83 = vmatprep.subr.mxu0 0.0
    %84 = vmatpush1.msra.mxu0 %v67
    %85 = vmatprep.subr.mxu0 0.0
    %86 = vmatpush1.msra.mxu0 %v68
    %87 = vmatprep.subr.mxu0 0.0
    %88 = vmatpush1.msra.mxu0 %v69
    %89 = vmatprep.subr.mxu0 0.0
    %90 = vmatpush1.msra.mxu0 %v70
    %91 = vmatprep.subr.mxu0 0.0
    %92 = vmatpush1.msra.mxu0 %v71
    %93 = vmatprep.subr.mxu0 0.0
    %94 = vmatpush1.msra.mxu0 %v72
    %95 = vmatprep.subr.mxu0 0.0
    %96 = vmatpush1.msra.mxu0 %v73
    %97 = vmatprep.subr.mxu0 0.0
    %98 = vmatpush1.msra.mxu0 %v74
    %99 = vmatprep.subr.mxu0 0.0
    %100 = vmatpush1.msra.mxu0 %v75
    %101 = vmatprep.subr.mxu0 0.0
    %102 = vmatpush1.msra.mxu0 %v76
    %103 = vmatprep.subr.mxu0 0.0
    %104 = vmatpush1.msra.mxu0 %v77
    %105 = vmatprep.subr.mxu0 0.0
    %106 = vmatpush1.msra.mxu0 %v78
    %107 = vmatprep.subr.mxu0 0.0
    %108 = vmatpush1.msra.mxu0 %v79
    %109 = vmatprep.subr.mxu0 0.0
    %110 = vmatpush1.msra.mxu0 %v80
    %111 = vmatprep.subr.mxu0 0.0
    %112 = vmatpush1.msra.mxu0 %v81
    %113 = vmatprep.subr.mxu0 0.0
    %114 = vmatpush1.msra.mxu0 %v82
    %115 = vmatprep.subr.mxu0 0.0
    %116 = vmatpush1.msra.mxu0 0.0
    %117 = vmatprep.subr.mxu0 0.0
    %118 = vmatpush1.msra.mxu0 0.0
    %119 = vmatprep.subr.mxu0 0.0
    %120 = vmatpush1.msra.mxu0 0.0
    %121 = vmatprep.subr.mxu0 0.0
    %122 = vmatpush1.msra.mxu0 0.0
    %123 = vmatprep.subr.mxu0 0.0
    %124 = vmatpush1.msra.mxu0 0.0
    %125 = vmatprep.subr.mxu0 0.0
    %126 = vmatpush1.msra.mxu0 0.0
    %127 = vmatprep.subr.mxu0 0.0
    %128 = vmatpush1.msra.mxu0 0.0
    %129 = vmatprep.subr.mxu0 0.0
    %130 = vmatpush1.msra.mxu0 0.0
    %131 = vmatprep.subr.mxu0 0.0
    %132 = vmatpush1.msra.mxu0 0.0
    %133 = vmatprep.subr.mxu0 0.0
    %134 = vmatpush1.msra.mxu0 0.0
    %135 = vmatprep.subr.mxu0 0.0
    %136 = vmatpush1.msra.mxu0 0.0
    %137 = vmatprep.subr.mxu0 0.0
    %138 = vmatpush1.msra.mxu0 0.0
    %139 = vmatprep.subr.mxu0 0.0
    %140 = vmatpush1.msra.mxu0 0.0
    %141 = vmatprep.subr.mxu0 0.0
    %142 = vmatpush1.msra.mxu0 0.0
    %143 = vmatprep.subr.mxu0 0.0
    %144 = vmatpush1.msra.mxu0 0.0
    %145 = vmatprep.subr.mxu0 0.0
    %146 = vmatpush1.msra.mxu0 0.0
    %147 = vmatprep.mubr.f32.mxu0 0.0
    %148 = vmatmul.mubr.f32.gmra.mrb[0].mxu0 %v66
    %v149 = vpop.f32.mrb[0].mxu0
    %v150 = vadd.f32 0.0, %v149
    %v151 = vpop.f32.mrb[0].mxu0
    %152 = vdwg.mxu0
    %v153 = vadd.f32 %v65, %v150
    %154 = vst [vmem:[#allocation2] sm:$0xff] %v153
    // Predicated region
    $region38: #{tpu_custom_call.1} parent=1 // pred_check
      %p155 = pneg %p60
    $region39: #{tpu_custom_call.1} parent=1 // pred_check_branch
      %157 = sbr.rel (%p155) target = $region41
    $region40: #{tpu_custom_call.1} parent=1 // pred_region
      %v158 = vld [vmem:[#allocation2] sm:$0xff]
      %v159 = vld [vmem:[%s2] sm:$0x1]
      %v161 = vlaneseq
      %v162 = vshrl.u32 %v161, 7
      %v163 = vsub.s32 0, %v162
      %v164 = vrot.slane %v159, %v163
      %v166 = vadd.f32 %v158, %v164
      %v167 = vmax.f32 %v166, 0.0
      %v168 = vld [vmem:[#allocation8] sm:$0xff]
      %v169 = vld [vmem:[#allocation8 + $0x8] sm:$0xff]
      %v170 = vld [vmem:[#allocation8 + $0x10] sm:$0xff]
      %v171 = vld [vmem:[#allocation8 + $0x18] sm:$0xff]
      %v172 = vld [vmem:[#allocation8 + $0x20] sm:$0xff]
      %v173 = vld [vmem:[#allocation8 + $0x28] sm:$0xff]
      %v174 = vld [vmem:[#allocation8 + $0x30] sm:$0xff]
      %v175 = vld [vmem:[#allocation8 + $0x38] sm:$0xff]
      %v176 = vld [vmem:[#allocation8 + $0x40] sm:$0xff]
      %v177 = vld [vmem:[#allocation8 + $0x48] sm:$0xff]
      %v178 = vld [vmem:[#allocation8 + $0x50] sm:$0xff]
      %v179 = vld [vmem:[#allocation8 + $0x58] sm:$0xff]
      %v180 = vld [vmem:[#allocation8 + $0x60] sm:$0xff]
      %v181 = vld [vmem:[#allocation8 + $0x68] sm:$0xff]
      %v182 = vld [vmem:[#allocation8 + $0x70] sm:$0xff]
      %v183 = vld [vmem:[#allocation8 + $0x78] sm:$0xff]
      %v184 = vld [vmem:[%s4] sm:$0x1]
      %v186 = vlaneseq
      %v187 = vshrl.u32 %v186, 7
      %v188 = vsub.s32 0, %v187
      %v189 = vrot.slane %v184, %v188
      %191 = vmatprep.subr.mxu0 0.0
      %192 = vmatpush1.msra.mxu0 %v168
      %193 = vmatprep.subr.mxu0 0.0
      %194 = vmatpush1.msra.mxu0 %v169
      %195 = vmatprep.subr.mxu0 0.0
      %196 = vmatpush1.msra.mxu0 %v170
      %197 = vmatprep.subr.mxu0 0.0
      %198 = vmatpush1.msra.mxu0 %v171
      %199 = vmatprep.subr.mxu0 0.0
      %200 = vmatpush1.msra.mxu0 %v172
      %201 = vmatprep.subr.mxu0 0.0
      %202 = vmatpush1.msra.mxu0 %v173
      %203 = vmatprep.subr.mxu0 0.0
      %204 = vmatpush1.msra.mxu0 %v174
      %205 = vmatprep.subr.mxu0 0.0
      %206 = vmatpush1.msra.mxu0 %v175
      %207 = vmatprep.subr.mxu0 0.0
      %208 = vmatpush1.msra.mxu0 %v176
      %209 = vmatprep.subr.mxu0 0.0
      %210 = vmatpush1.msra.mxu0 %v177
      %211 = vmatprep.subr.mxu0 0.0
      %212 = vmatpush1.msra.mxu0 %v178
      %213 = vmatprep.subr.mxu0 0.0
      %214 = vmatpush1.msra.mxu0 %v179
      %215 = vmatprep.subr.mxu0 0.0
      %216 = vmatpush1.msra.mxu0 %v180
      %217 = vmatprep.subr.mxu0 0.0
      %218 = vmatpush1.msra.mxu0 %v181
      %219 = vmatprep.subr.mxu0 0.0
      %220 = vmatpush1.msra.mxu0 %v182
      %221 = vmatprep.subr.mxu0 0.0
      %222 = vmatpush1.msra.mxu0 %v183
      %223 = vmatprep.subr.mxu0 0.0
      %224 = vmatpush1.msra.mxu0 0.0
      %225 = vmatprep.subr.mxu0 0.0
      %226 = vmatpush1.msra.mxu0 0.0
      %227 = vmatprep.subr.mxu0 0.0
      %228 = vmatpush1.msra.mxu0 0.0
      %229 = vmatprep.subr.mxu0 0.0
      %230 = vmatpush1.msra.mxu0 0.0
      %231 = vmatprep.subr.mxu0 0.0
      %232 = vmatpush1.msra.mxu0 0.0
      %233 = vmatprep.subr.mxu0 0.0
      %234 = vmatpush1.msra.mxu0 0.0
      %235 = vmatprep.subr.mxu0 0.0
      %236 = vmatpush1.msra.mxu0 0.0
      %237 = vmatprep.subr.mxu0 0.0
      %238 = vmatpush1.msra.mxu0 0.0
      %239 = vmatprep.subr.mxu0 0.0
      %240 = vmatpush1.msra.mxu0 0.0
      %241 = vmatprep.subr.mxu0 0.0
      %242 = vmatpush1.msra.mxu0 0.0
      %243 = vmatprep.subr.mxu0 0.0
      %244 = vmatpush1.msra.mxu0 0.0
      %245 = vmatprep.subr.mxu0 0.0
      %246 = vmatpush1.msra.mxu0 0.0
      %247 = vmatprep.subr.mxu0 0.0
      %248 = vmatpush1.msra.mxu0 0.0
      %249 = vmatprep.subr.mxu0 0.0
      %250 = vmatpush1.msra.mxu0 0.0
      %251 = vmatprep.subr.mxu0 0.0
      %252 = vmatpush1.msra.mxu0 0.0
      %253 = vmatprep.subr.mxu0 0.0
      %254 = vmatpush1.msra.mxu0 0.0
      %255 = vmatprep.mubr.f32.mxu0 0.0
      %256 = vmatmul.mubr.f32.gmra.mrb[0].mxu0 %v167
      %v257 = vpop.f32.mrb[0].mxu0
      %v258 = vadd.f32 %v189, %v257
      %v259 = vpop.f32.mrb[0].mxu0
      %260 = vdwg.mxu0
      %261 = vst [vmem:[#allocation9] sm:$0xff] %v258
    $region41: #{tpu_custom_call.1} parent=1 // pred_fallthru
      _
    // Predicated region
    $region42: #{tpu_custom_call.1} parent=1 // pred_check
      _
    $region43: #{tpu_custom_call.1} parent=1 // pred_check_branch
      %263 = sbr.rel (0) target = $region45
    $region44: #{tpu_custom_call.1} parent=1 // pred_region
      %s265 = ssub.s32 128, 128
      %266 = vsyncadd [#allocation5], %s265
      %s268 = sshll.u32 [#allocation9], 4
      %s269 = int_to_ptr.vmem [resolvable:$true] %s268
      %271 = dma.vmem_to_hbm [thread:$0]  %s269, 128, %s5, [#allocation5]
    $region45: #{tpu_custom_call.1} parent=1 // pred_fallthru
      _
    // Predicated region
    $region46: #{tpu_custom_call.1} parent=1 // pred_check
      _
    $region47: #{tpu_custom_call.1} parent=1 // pred_check_branch
      %273 = sbr.rel (0) target = $region49
    $region48: #{tpu_custom_call.1} parent=1 // pred_region
      %274 = dma.done [#allocation5], 128
    $region49: #{tpu_custom_call.1} parent=1 // pred_fallthru
      _
    %275 = vsyncpa [#allocation4], 1
    %276 = vsyncpa [#allocation7], 1
    %277 = vsyncpa [#allocation5], 1

</llo_original>
